<compile_context>
chip_gen: v6e
topology: v6e:2x2x1
jax: 0.10.0
libtpu: 0.0.40
codegen_flags: <defaults>
</compile_context>

<pallas_src>
import jax
import jax.numpy as jnp
from jax.experimental import pallas as pl
from jax.experimental.pallas import tpu as pltpu


def _mlp_kernel(x_ref, w1_ref, b1_ref, w2_ref, b2_ref, w3_ref, b3_ref, o_ref):
    # In-kernel cast of the streamed x tile to the MXU dtype (hides under MXU).
    x = x_ref[...].astype(w1_ref.dtype)

    # Layer 1: (TB, in) @ (in, H) on the MXU, f32 accumulation; bias+ReLU in f32.
    h1 = jnp.dot(x, w1_ref[...], preferred_element_type=jnp.float32)
    h1 = jnp.maximum(h1 + b1_ref[...], 0.0)

    # Layer 2: (TB, H) @ (H, H).
    h2 = jnp.dot(h1.astype(w2_ref.dtype), w2_ref[...],
                 preferred_element_type=jnp.float32)
    h2 = jnp.maximum(h2 + b2_ref[...], 0.0)

    # Layer 3 (H -> 1): contract the hidden dim of the (1, H) weight row with
    # (TB, H) h2 -> lane-dense (1, TB) logit row (no N=1 matmul, no masked
    # single-lane stores).
    logit = jax.lax.dot_general(
        w3_ref[...], h2.astype(w3_ref.dtype),
        dimension_numbers=(((1,), (1,)), ((), ())),
        preferred_element_type=jnp.float32,
    )
    logit = logit + b3_ref[0]  # scalar bias from SMEM

    o_ref[...] = jax.nn.sigmoid(logit).reshape(o_ref.shape).astype(o_ref.dtype)


def _round_up(n, m):
    return int(pl.cdiv(n, m)) * m


def _resident_spec(shape):
    """Full-array resident block (constant index_map); single-buffered if possible."""
    idx = lambda i: tuple(0 for _ in shape)
    try:
        return pl.BlockSpec(shape, idx, pipeline_mode=pl.Buffered(1))
    except TypeError:  # older jax without pipeline_mode kwarg
        return pl.BlockSpec(shape, idx)


def prepare_params(w1, b1, w2, b2, w3, b3, *, matmul_dtype=jnp.bfloat16):
    """Cast/reshape parameters ONCE into kernel-ready form (do this outside the
    per-step call path and reuse the result)."""
    hidden = w1.shape[1]
    return (
        w1.astype(matmul_dtype),                       # (in, H)
        b1.reshape(1, hidden).astype(jnp.float32),     # (1, H)
        w2.astype(matmul_dtype),                       # (H, H)
        b2.reshape(1, hidden).astype(jnp.float32),     # (1, H)
        w3.reshape(1, hidden).astype(matmul_dtype),    # (1, H) weight row
        b3.reshape(1).astype(jnp.float32),             # scalar via SMEM
    )


def domain_discriminator(x, prepared_params, *, block_b=512):
    """Forward pass of DomainDiscriminator as one fused, batch-tiled kernel.

    x               : (B, input_dim), any float dtype (cast in-kernel)
    prepared_params : output of prepare_params(...)
    returns (B, 1) float32 in [0, 1]
    """
    w1_c, b1_r, w2_c, b2_r, w3_row, b3_s = prepared_params
    B, input_dim = x.shape
    hidden = w1_c.shape[1]
    assert block_b % 128 == 0, "block_b must be a multiple of 128"

    # Batch tile: multiple of 128 (lane-dense output / MXU M), no padding of x.
    tb = min(block_b, _round_up(B, 128))
    # Prefer >= 2 grid tiles so both v7x TensorCores get work.
    if B > 128 and int(pl.cdiv(B, tb)) < 2:
        tb = max(128, _round_up(int(pl.cdiv(B, 2)), 128))
    # Cap tb so the double-buffered x stream stays small vs. v7x's 64 MiB VMEM.
    x_row_bytes = input_dim * x.dtype.itemsize
    max_tb = max(128, ((8 << 20) // (2 * x_row_bytes)) // 128 * 128)
    tb = max(128, min(tb, max_tb))

    num_tiles = int(pl.cdiv(B, tb))

    flops = 2 * B * (input_dim * hidden + hidden * hidden + hidden)
    bytes_accessed = (x.size * x.dtype.itemsize
                      + w1_c.size * w1_c.dtype.itemsize
                      + w2_c.size * w2_c.dtype.itemsize
                      + w3_row.size * w3_row.dtype.itemsize
                      + (b1_r.size + b2_r.size + b3_s.size) * 4
                      + B * 4)

    out_slab = pl.pallas_call(
        _mlp_kernel,
        grid=(num_tiles,),
        in_specs=[
            pl.BlockSpec((tb, input_dim), lambda i: (i, 0)),  # x tile streams (depth-2)
            _resident_spec((input_dim, hidden)),              # w1 resident
            _resident_spec((1, hidden)),                      # b1 resident
            _resident_spec((hidden, hidden)),                 # w2 resident
            _resident_spec((1, hidden)),                      # b2 resident
            _resident_spec((1, hidden)),                      # w3 row resident
            pl.BlockSpec(memory_space=pltpu.SMEM),            # b3 scalar
        ],
        out_specs=pl.BlockSpec((1, 1, tb), lambda i: (i, 0, 0)),  # lane-dense
        out_shape=jax.ShapeDtypeStruct((num_tiles, 1, tb), jnp.float32),
        compiler_params=pltpu.CompilerParams(
            dimension_semantics=("parallel",),
            vmem_limit_bytes=32 * 1024 * 1024),
        cost_estimate=pl.CostEstimate(flops=flops,
                                      transcendentals=2 * B,
                                      bytes_accessed=bytes_accessed),
    )(x, w1_c, b1_r, w2_c, b2_r, w3_row, b3_s)

    # (num_tiles, 1, tb) -> (num_tiles*tb, 1); junk tail rows (partial last
    # tile) are discarded here -- valid because rows are fully independent.
    return out_slab.reshape(num_tiles * tb, 1)[:B]


def init_params(key, input_dim=512, hidden_dim=256):
    """Deterministic parameter init (PyTorch nn.Linear-like uniform bounds)."""
    ks = jax.random.split(key, 6)

    def uinit(k, shape, fan_in):
        bound = 1.0 / jnp.sqrt(fan_in)
        return jax.random.uniform(k, shape, jnp.float32, -bound, bound)

    w1 = uinit(ks[0], (input_dim, hidden_dim), input_dim)
    b1 = uinit(ks[1], (1, hidden_dim), input_dim)
    w2 = uinit(ks[2], (hidden_dim, hidden_dim), hidden_dim)
    b2 = uinit(ks[3], (1, hidden_dim), hidden_dim)
    w3 = uinit(ks[4], (hidden_dim, 1), hidden_dim)
    b3 = uinit(ks[5], (1, 1), hidden_dim)
    return w1, b1, w2, b2, w3, b3


if __name__ == "__main__":
    key = jax.random.PRNGKey(0)
    k_x, k_p, k_x2 = jax.random.split(key, 3)

    INPUT_DIM, HIDDEN_DIM = 512, 256
    w1, b1, w2, b2, w3, b3 = init_params(k_p, INPUT_DIM, HIDDEN_DIM)

    def ref_fwd(x):
        h1 = jnp.maximum(x @ w1 + b1, 0.0)
        h2 = jnp.maximum(h1 @ w2 + b2, 0.0)
        return jax.nn.sigmoid(h2 @ w3 + b3)

    # 1) f32 MXU path, small batch -> single partial tile (no pad, tail sliced).
    p_f32 = prepare_params(w1, b1, w2, b2, w3, b3, matmul_dtype=jnp.float32)
    B = 8
    x = jax.random.normal(k_x, (B, INPUT_DIM), jnp.float32)
    out = jax.block_until_ready(domain_discriminator(x, p_f32))
    assert out.shape == (B, 1)
    assert jnp.allclose(out, ref_fwd(x), atol=1e-4, rtol=1e-4)

    # 2) bf16 default path, batch with multiple grid tiles + partial tail.
    p_bf16 = prepare_params(w1, b1, w2, b2, w3, b3)  # bf16 default
    B2 = 300
    x2 = jax.random.normal(k_x2, (B2, INPUT_DIM), jnp.float32)
    out2 = jax.block_until_ready(domain_discriminator(x2, p_bf16, block_b=512))
    assert out2.shape == (B2, 1)
    assert jnp.allclose(out2, ref_fwd(x2), atol=5e-2, rtol=5e-2)

    # 3) bf16 with small block to exercise >2 grid tiles.
    out3 = jax.block_until_ready(domain_discriminator(x2, p_bf16, block_b=128))
    assert out3.shape == (B2, 1)
    assert jnp.allclose(out3, ref_fwd(x2), atol=5e-2, rtol=5e-2)

    print("KERNEL_OK")
</pallas_src>

<mosaic_0001>
module attributes {stable_mosaic.version = 11 : i64} {
  func.func @_mlp_kernel(%arg0: i32, %arg1: memref<128x512xf32, #tpu.memory_space<vmem>>, %arg2: memref<512x256xf32, #tpu.memory_space<vmem>>, %arg3: memref<1x256xf32, #tpu.memory_space<vmem>>, %arg4: memref<256x256xf32, #tpu.memory_space<vmem>>, %arg5: memref<1x256xf32, #tpu.memory_space<vmem>>, %arg6: memref<1x256xf32, #tpu.memory_space<vmem>>, %arg7: memref<1xf32, #tpu.memory_space<smem>>, %arg8: memref<1x1x128xf32, #tpu.memory_space<vmem>>) attributes {dimension_semantics = [#tpu.dimension_semantics<parallel>], iteration_bounds = array<i64: 1>, scalar_prefetch = 0 : i64, scratch_operands = 0 : i64, tpu.core_type = #tpu.core_type<tc>, window_params = [{transform_indices = @transform_0, window_bounds = array<i64: 128, 512>}, {pipeline_mode = #tpu.pipeline_mode<synchronous>, transform_indices = @transform_1, window_bounds = array<i64: 512, 256>}, {pipeline_mode = #tpu.pipeline_mode<synchronous>, transform_indices = @transform_2, window_bounds = array<i64: 1, 256>}, {pipeline_mode = #tpu.pipeline_mode<synchronous>, transform_indices = @transform_3, window_bounds = array<i64: 256, 256>}, {pipeline_mode = #tpu.pipeline_mode<synchronous>, transform_indices = @transform_4, window_bounds = array<i64: 1, 256>}, {pipeline_mode = #tpu.pipeline_mode<synchronous>, transform_indices = @transform_5, window_bounds = array<i64: 1, 256>}, {transform_indices = @transform_6, window_bounds = array<i64: 1>}, {transform_indices = @transform_7, window_bounds = array<i64: 1, 1, 128>}]} {
    %c0 = arith.constant 0 : index
    %c0_0 = arith.constant 0 : index
    %0 = vector.load %arg1[%c0, %c0_0] : memref<128x512xf32, #tpu.memory_space<vmem>>, vector<128x512xf32>
    %c0_1 = arith.constant 0 : index
    %c0_2 = arith.constant 0 : index
    %1 = vector.load %arg2[%c0_1, %c0_2] : memref<512x256xf32, #tpu.memory_space<vmem>>, vector<512x256xf32>
    %cst = arith.constant dense<0.000000e+00> : vector<128x256xf32>
    %2 = tpu.matmul %0, %1, %cst {dimension_numbers = #tpu.dot_dimension_numbers<[1], [0], [0], [1], [0, 0, 1, 1], [], []>} : vector<128x512xf32>, vector<512x256xf32>, vector<128x256xf32> -> vector<128x256xf32>
    %c0_3 = arith.constant 0 : index
    %c0_4 = arith.constant 0 : index
    %3 = vector.load %arg3[%c0_3, %c0_4] : memref<1x256xf32, #tpu.memory_space<vmem>>, vector<1x256xf32>
    %4 = vector.broadcast %3 : vector<1x256xf32> to vector<128x256xf32>
    %5 = arith.addf %2, %4 : vector<128x256xf32>
    %cst_5 = arith.constant 0.000000e+00 : f32
    %6 = vector.broadcast %cst_5 : f32 to vector<128x256xf32>
    %7 = arith.maximumf %5, %6 : vector<128x256xf32>
    %c0_6 = arith.constant 0 : index
    %c0_7 = arith.constant 0 : index
    %8 = vector.load %arg4[%c0_6, %c0_7] : memref<256x256xf32, #tpu.memory_space<vmem>>, vector<256x256xf32>
    %cst_8 = arith.constant dense<0.000000e+00> : vector<128x256xf32>
    %9 = tpu.matmul %7, %8, %cst_8 {dimension_numbers = #tpu.dot_dimension_numbers<[1], [0], [0], [1], [0, 0, 1, 1], [], []>} : vector<128x256xf32>, vector<256x256xf32>, vector<128x256xf32> -> vector<128x256xf32>
    %c0_9 = arith.constant 0 : index
    %c0_10 = arith.constant 0 : index
    %10 = vector.load %arg5[%c0_9, %c0_10] : memref<1x256xf32, #tpu.memory_space<vmem>>, vector<1x256xf32>
    %11 = vector.broadcast %10 : vector<1x256xf32> to vector<128x256xf32>
    %12 = arith.addf %9, %11 : vector<128x256xf32>
    %cst_11 = arith.constant 0.000000e+00 : f32
    %13 = vector.broadcast %cst_11 : f32 to vector<128x256xf32>
    %14 = arith.maximumf %12, %13 : vector<128x256xf32>
    %c0_12 = arith.constant 0 : index
    %c0_13 = arith.constant 0 : index
    %15 = vector.load %arg6[%c0_12, %c0_13] : memref<1x256xf32, #tpu.memory_space<vmem>>, vector<1x256xf32>
    %cst_14 = arith.constant dense<0.000000e+00> : vector<1x128xf32>
    %16 = tpu.matmul %15, %14, %cst_14 {dimension_numbers = #tpu.dot_dimension_numbers<[1], [1], [0], [0], [0, 0, 1, 0], [], []>} : vector<1x256xf32>, vector<128x256xf32>, vector<1x128xf32> -> vector<1x128xf32>
    %c0_15 = arith.constant 0 : index
    %17 = memref.load %arg7[%c0_15] : memref<1xf32, #tpu.memory_space<smem>>
    %18 = vector.broadcast %17 : f32 to vector<1x128xf32>
    %19 = arith.addf %16, %18 : vector<1x128xf32>
    %20 = arith.negf %19 : vector<1x128xf32>
    %21 = math.exp %20 : vector<1x128xf32>
    %cst_16 = arith.constant 1.000000e+00 : f32
    %22 = vector.broadcast %cst_16 : f32 to vector<1x128xf32>
    %23 = arith.addf %22, %21 : vector<1x128xf32>
    %24 = arith.divf %22, %23 : vector<1x128xf32>
    %25 = vector.shape_cast %24 : vector<1x128xf32> to vector<1x1x128xf32>
    %c0_17 = arith.constant 0 : index
    %c0_18 = arith.constant 0 : index
    %c0_19 = arith.constant 0 : index
    %26 = vector.load %arg8[%c0_17, %c0_18, %c0_19] : memref<1x1x128xf32, #tpu.memory_space<vmem>>, vector<1x1x128xf32>
    tpu.vector_store %arg8[%c0_17, %c0_18, %c0_19], %25 {strides = array<i32>} : memref<1x1x128xf32, #tpu.memory_space<vmem>>, vector<1x1x128xf32>,
    return
  }
  func.func @transform_0(%arg0: i32) -> (i32, i32) {
    %c0_i32 = arith.constant 0 : i32
    %c0_i32_0 = arith.constant 0 : i32
    return %arg0, %c0_i32 : i32, i32
  }
  func.func @transform_1(%arg0: i32) -> (i32, i32) {
    %c0_i32 = arith.constant 0 : i32
    %c0_i32_0 = arith.constant 0 : i32
    %c0_i32_1 = arith.constant 0 : i32
    return %c0_i32, %c0_i32_0 : i32, i32
  }
  func.func @transform_2(%arg0: i32) -> (i32, i32) {
    %c0_i32 = arith.constant 0 : i32
    %c0_i32_0 = arith.constant 0 : i32
    %c0_i32_1 = arith.constant 0 : i32
    return %c0_i32, %c0_i32_0 : i32, i32
  }
  func.func @transform_3(%arg0: i32) -> (i32, i32) {
    %c0_i32 = arith.constant 0 : i32
    %c0_i32_0 = arith.constant 0 : i32
    %c0_i32_1 = arith.constant 0 : i32
    return %c0_i32, %c0_i32_0 : i32, i32
  }
  func.func @transform_4(%arg0: i32) -> (i32, i32) {
    %c0_i32 = arith.constant 0 : i32
    %c0_i32_0 = arith.constant 0 : i32
    %c0_i32_1 = arith.constant 0 : i32
    return %c0_i32, %c0_i32_0 : i32, i32
  }
  func.func @transform_5(%arg0: i32) -> (i32, i32) {
    %c0_i32 = arith.constant 0 : i32
    %c0_i32_0 = arith.constant 0 : i32
    %c0_i32_1 = arith.constant 0 : i32
    return %c0_i32, %c0_i32_0 : i32, i32
  }
  func.func @transform_6(%arg0: i32) -> i32 {
    %c0_i32 = arith.constant 0 : i32
    %c0_i32_0 = arith.constant 0 : i32
    return %c0_i32 : i32
  }
  func.func @transform_7(%arg0: i32) -> (i32, i32, i32) {
    %c0_i32 = arith.constant 0 : i32
    %c0_i32_0 = arith.constant 0 : i32
    %c0_i32_1 = arith.constant 0 : i32
    return %arg0, %c0_i32, %c0_i32_0 : i32, i32, i32
  }
}

</mosaic_0001>

<llo_original>
// kernel: tpu_custom_call.1
$region0: #{tpu_custom_call.1}
  #allocation0 [shape = 'u32[]', space=smem, size = 0x4, offset = 0x4, fixed_abs, tag = 'smem constant byte address 0x4 - core index']
  #allocation1 [shape = 'u32[144,128]{1,0:T(1,128)}', space=vmem, size = 0x12000, scoped, tag = 'internal scratch']
  #allocation2 [shape = 'f32[1]{0:T(128)S(6)}', space=smem, size = 0x200, scoped, tag = 'scoped memory for tpu_custom_call.1']
  %s0 = inlined_call_operand.hbm [shape: f32[8,512], index: 0, kind: input, shape index: {}]
  %s1 = inlined_call_operand.hbm [shape: f32[512,256], index: 1, kind: input, shape index: {}]
  %s2 = inlined_call_operand.vmem [shape: f32[1,256], index: 2, kind: input, shape index: {}]
  %s3 = inlined_call_operand.hbm [shape: f32[256,256], index: 3, kind: input, shape index: {}]
  %s4 = inlined_call_operand.vmem [shape: f32[1,256], index: 4, kind: input, shape index: {}]
  %s5 = inlined_call_operand.vmem [shape: f32[1,256], index: 5, kind: input, shape index: {}]
  %s6 = inlined_call_operand.<no memory space> [shape: f32[1], index: 6, kind: input, shape index: {}]
  %s7 = inlined_call_operand.hbm [shape: f32[1,1,128], index: 7, kind: output, shape index: {}]
  %s8 = sld [smem:[#allocation0]]
  $region50: #{tpu_custom_call.1} parent=0
    _
  %s10 = ssub.s32 1, %s8
  %s11 = scalar_select 0, %s10, %s8
  %12 = sst [smem:[#allocation2]] %s6
  $region1: #{tpu_custom_call.1} parent=0
    #allocation3 [shape = 'u8[262144]{0}', space=vmem, size = 0x40000, scoped, tag = 'input window, operand 0, single buffered']
    #allocation4 [shape = 's32[1]{0}', space=sflag, size = 0x4, scoped, tag = 'scoped memory for tpu_custom_call.1']
    #allocation5 [shape = 's32[1]{0}', space=sflag, size = 0x4, scoped, tag = 'scoped memory for tpu_custom_call.1']
    #allocation6 [shape = 'u8[524288]{0}', space=vmem, size = 0x80000, scoped, tag = 'input window, operand 1, single buffered']
    #allocation7 [shape = 's32[1]{0}', space=sflag, size = 0x4, scoped, tag = 'scoped memory for tpu_custom_call.1']
    #allocation8 [shape = 'u8[262144]{0}', space=vmem, size = 0x40000, scoped, tag = 'input window, operand 3, single buffered']
    #allocation9 [shape = 'u8[512]{0}', space=vmem, size = 0x400, scoped, tag = 'output window, operand 0, single buffered']
    %13 = vsyncpa [#allocation4], 0
    %14 = vsyncpa [#allocation7], 0
    %15 = vsyncpa [#allocation5], 0
    // Predicated region
    $region2: #{tpu_custom_call.1} parent=1 // pred_check
      _
    $region3: #{tpu_custom_call.1} parent=1 // pred_check_branch
      %17 = sbr.rel (0) target = $region5
    $region4: #{tpu_custom_call.1} parent=1 // pred_region
      %s19 = ssub.s32 8192, 512
      %20 = vsyncadd [#allocation4], %s19
      %s21 = sshll.u32 [#allocation3], 4
      %s22 = int_to_ptr.vmem [resolvable:$true] %s21
      %27 = dma.hbm_to_vmem [thread:$0]  %s0, 512, %s22, [#allocation4], 512, 512, 32
    $region5: #{tpu_custom_call.1} parent=1 // pred_fallthru
      _
    // Predicated region
    $region6: #{tpu_custom_call.1} parent=1 // pred_check
      _
    $region7: #{tpu_custom_call.1} parent=1 // pred_check_branch
      %29 = sbr.rel (0) target = $region9
    $region8: #{tpu_custom_call.1} parent=1 // pred_region
      %s31 = ssub.s32 16384, 16384
      %32 = vsyncadd [#allocation7], %s31
      %s33 = sshll.u32 [#allocation6], 4
      %s34 = int_to_ptr.vmem [resolvable:$true] %s33
      %39 = dma.hbm_to_vmem [thread:$0]  %s1, 16384, %s34, [#allocation7], 256, 256, 16
    $region9: #{tpu_custom_call.1} parent=1 // pred_fallthru
      _
    // Predicated region
    $region10: #{tpu_custom_call.1} parent=1 // pred_check
      _
    $region11: #{tpu_custom_call.1} parent=1 // pred_check_branch
      %41 = sbr.rel (0) target = $region13
    $region12: #{tpu_custom_call.1} parent=1 // pred_region
      _
    $region13: #{tpu_custom_call.1} parent=1 // pred_fallthru
      _
    // Predicated region
    $region14: #{tpu_custom_call.1} parent=1 // pred_check
      _
    $region15: #{tpu_custom_call.1} parent=1 // pred_check_branch
      %43 = sbr.rel (0) target = $region17
    $region16: #{tpu_custom_call.1} parent=1 // pred_region
      %s45 = ssub.s32 8192, 8192
      %46 = vsyncadd [#allocation7], %s45
      %s47 = sshll.u32 [#allocation8], 4
      %s48 = int_to_ptr.vmem [resolvable:$true] %s47
      %53 = dma.hbm_to_vmem [thread:$0]  %s3, 8192, %s48, [#allocation7], 256, 256, 16
    $region17: #{tpu_custom_call.1} parent=1 // pred_fallthru
      _
    // Predicated region
    $region18: #{tpu_custom_call.1} parent=1 // pred_check
      _
    $region19: #{tpu_custom_call.1} parent=1 // pred_check_branch
      %55 = sbr.rel (0) target = $region21
    $region20: #{tpu_custom_call.1} parent=1 // pred_region
      _
    $region21: #{tpu_custom_call.1} parent=1 // pred_fallthru
      _
    // Predicated region
    $region22: #{tpu_custom_call.1} parent=1 // pred_check
      _
    $region23: #{tpu_custom_call.1} parent=1 // pred_check_branch
      %57 = sbr.rel (0) target = $region25
    $region24: #{tpu_custom_call.1} parent=1 // pred_region
      _
    $region25: #{tpu_custom_call.1} parent=1 // pred_fallthru
      _
    // Predicated region
    $region26: #{tpu_custom_call.1} parent=1 // pred_check
      _
    $region27: #{tpu_custom_call.1} parent=1 // pred_check_branch
      %59 = sbr.rel (0) target = $region29
    $region28: #{tpu_custom_call.1} parent=1 // pred_region
      _
    $region29: #{tpu_custom_call.1} parent=1 // pred_fallthru
      _
    // Predicated region
    $region30: #{tpu_custom_call.1} parent=1 // pred_check
      _
    $region31: #{tpu_custom_call.1} parent=1 // pred_check_branch
      %61 = sbr.rel (0) target = $region33
    $region32: #{tpu_custom_call.1} parent=1 // pred_region
      %62 = dma.done [#allocation4], 8192
    $region33: #{tpu_custom_call.1} parent=1 // pred_fallthru
      _
    // Predicated region
    $region34: #{tpu_custom_call.1} parent=1 // pred_check
      _
    $region35: #{tpu_custom_call.1} parent=1 // pred_check_branch
      %64 = sbr.rel (0) target = $region37
    $region36: #{tpu_custom_call.1} parent=1 // pred_region
      %65 = dma.done [#allocation7], 16384
    $region37: #{tpu_custom_call.1} parent=1 // pred_fallthru
      _
    // Predicated region
    $region38: #{tpu_custom_call.1} parent=1 // pred_check
      _
    $region39: #{tpu_custom_call.1} parent=1 // pred_check_branch
      %67 = sbr.rel (0) target = $region41
    $region40: #{tpu_custom_call.1} parent=1 // pred_region
      %68 = dma.done [#allocation7], 8192
    $region41: #{tpu_custom_call.1} parent=1 // pred_fallthru
      _
    %v69 = vld [vmem:[#allocation3] sm:$0xff]
    %v70 = vld [vmem:[#allocation3 + $0x8] sm:$0xff]
    %v71 = vld [vmem:[#allocation3 + $0x10] sm:$0xff]
    %v72 = vld [vmem:[#allocation3 + $0x18] sm:$0xff]
    %v73 = vld [vmem:[#allocation3 + $0x20] sm:$0xff]
    %v74 = vld [vmem:[#allocation3 + $0x28] sm:$0xff]
    %v75 = vld [vmem:[#allocation3 + $0x30] sm:$0xff]
    %v76 = vld [vmem:[#allocation3 + $0x38] sm:$0xff]
    %v77 = vld [vmem:[#allocation3 + $0x40] sm:$0xff]
    %v78 = vld [vmem:[#allocation3 + $0x48] sm:$0xff]
    %v79 = vld [vmem:[#allocation3 + $0x50] sm:$0xff]
    %v80 = vld [vmem:[#allocation3 + $0x58] sm:$0xff]
    %v81 = vld [vmem:[#allocation3 + $0x60] sm:$0xff]
    %v82 = vld [vmem:[#allocation3 + $0x68] sm:$0xff]
    %v83 = vld [vmem:[#allocation3 + $0x70] sm:$0xff]
    %v84 = vld [vmem:[#allocation3 + $0x78] sm:$0xff]
    %v85 = vld [vmem:[#allocation3 + $0x80] sm:$0xff]
    %v86 = vld [vmem:[#allocation3 + $0x88] sm:$0xff]
    %v87 = vld [vmem:[#allocation3 + $0x90] sm:$0xff]
    %v88 = vld [vmem:[#allocation3 + $0x98] sm:$0xff]
    %v89 = vld [vmem:[#allocation3 + $0xa0] sm:$0xff]
    %v90 = vld [vmem:[#allocation3 + $0xa8] sm:$0xff]
    %v91 = vld [vmem:[#allocation3 + $0xb0] sm:$0xff]
    %v92 = vld [vmem:[#allocation3 + $0xb8] sm:$0xff]
    %v93 = vld [vmem:[#allocation3 + $0xc0] sm:$0xff]
    %v94 = vld [vmem:[#allocation3 + $0xc8] sm:$0xff]
    %v95 = vld [vmem:[#allocation3 + $0xd0] sm:$0xff]
    %v96 = vld [vmem:[#allocation3 + $0xd8] sm:$0xff]
    %v97 = vld [vmem:[#allocation3 + $0xe0] sm:$0xff]
    %v98 = vld [vmem:[#allocation3 + $0xe8] sm:$0xff]
    %v99 = vld [vmem:[#allocation3 + $0xf0] sm:$0xff]
    %v100 = vld [vmem:[#allocation3 + $0xf8] sm:$0xff]
    %v101 = vld [vmem:[#allocation3 + $0x100] sm:$0xff]
    %v102 = vld [vmem:[#allocation3 + $0x108] sm:$0xff]
    %v103 = vld [vmem:[#allocation3 + $0x110] sm:$0xff]
    %v104 = vld [vmem:[#allocation3 + $0x118] sm:$0xff]
    %v105 = vld [vmem:[#allocation3 + $0x120] sm:$0xff]
    %v106 = vld [vmem:[#allocation3 + $0x128] sm:$0xff]
    %v107 = vld [vmem:[#allocation3 + $0x130] sm:$0xff]
    %v108 = vld [vmem:[#allocation3 + $0x138] sm:$0xff]
    %v109 = vld [vmem:[#allocation3 + $0x140] sm:$0xff]
    %v110 = vld [vmem:[#allocation3 + $0x148] sm:$0xff]
    %v111 = vld [vmem:[#allocation3 + $0x150] sm:$0xff]
    %v112 = vld [vmem:[#allocation3 + $0x158] sm:$0xff]
    %v113 = vld [vmem:[#allocation3 + $0x160] sm:$0xff]
    %v114 = vld [vmem:[#allocation3 + $0x168] sm:$0xff]
    %v115 = vld [vmem:[#allocation3 + $0x170] sm:$0xff]
    %v116 = vld [vmem:[#allocation3 + $0x178] sm:$0xff]
    %v117 = vld [vmem:[#allocation3 + $0x180] sm:$0xff]
    %v118 = vld [vmem:[#allocation3 + $0x188] sm:$0xff]
    %v119 = vld [vmem:[#allocation3 + $0x190] sm:$0xff]
    %v120 = vld [vmem:[#allocation3 + $0x198] sm:$0xff]
    %v121 = vld [vmem:[#allocation3 + $0x1a0] sm:$0xff]
    %v122 = vld [vmem:[#allocation3 + $0x1a8] sm:$0xff]
    %v123 = vld [vmem:[#allocation3 + $0x1b0] sm:$0xff]
    %v124 = vld [vmem:[#allocation3 + $0x1b8] sm:$0xff]
    %v125 = vld [vmem:[#allocation3 + $0x1c0] sm:$0xff]
    %v126 = vld [vmem:[#allocation3 + $0x1c8] sm:$0xff]
    %v127 = vld [vmem:[#allocation3 + $0x1d0] sm:$0xff]
    %v128 = vld [vmem:[#allocation3 + $0x1d8] sm:$0xff]
    %v129 = vld [vmem:[#allocation3 + $0x1e0] sm:$0xff]
    %v130 = vld [vmem:[#allocation3 + $0x1e8] sm:$0xff]
    %v131 = vld [vmem:[#allocation3 + $0x1f0] sm:$0xff]
    %v132 = vld [vmem:[#allocation3 + $0x1f8] sm:$0xff]
    %v133 = vld [vmem:[#allocation6] sm:$0xff]
    %v134 = vld [vmem:[#allocation6 + $0x8] sm:$0xff]
    %v135 = vld [vmem:[#allocation6 + $0x10] sm:$0xff]
    %v136 = vld [vmem:[#allocation6 + $0x18] sm:$0xff]
    %v137 = vld [vmem:[#allocation6 + $0x20] sm:$0xff]
    %v138 = vld [vmem:[#allocation6 + $0x28] sm:$0xff]
    %v139 = vld [vmem:[#allocation6 + $0x30] sm:$0xff]
    %v140 = vld [vmem:[#allocation6 + $0x38] sm:$0xff]
    %v141 = vld [vmem:[#allocation6 + $0x40] sm:$0xff]
    %v142 = vld [vmem:[#allocation6 + $0x48] sm:$0xff]
    %v143 = vld [vmem:[#allocation6 + $0x50] sm:$0xff]
    %v144 = vld [vmem:[#allocation6 + $0x58] sm:$0xff]
    %v145 = vld [vmem:[#allocation6 + $0x60] sm:$0xff]
    %v146 = vld [vmem:[#allocation6 + $0x68] sm:$0xff]
    %v147 = vld [vmem:[#allocation6 + $0x70] sm:$0xff]
    %v148 = vld [vmem:[#allocation6 + $0x78] sm:$0xff]
    %v149 = vld [vmem:[#allocation6 + $0x80] sm:$0xff]
    %v150 = vld [vmem:[#allocation6 + $0x88] sm:$0xff]
    %v151 = vld [vmem:[#allocation6 + $0x90] sm:$0xff]
    %v152 = vld [vmem:[#allocation6 + $0x98] sm:$0xff]
    %v153 = vld [vmem:[#allocation6 + $0xa0] sm:$0xff]
    %v154 = vld [vmem:[#allocation6 + $0xa8] sm:$0xff]
    %v155 = vld [vmem:[#allocation6 + $0xb0] sm:$0xff]
    %v156 = vld [vmem:[#allocation6 + $0xb8] sm:$0xff]
    %v157 = vld [vmem:[#allocation6 + $0xc0] sm:$0xff]
    %v158 = vld [vmem:[#allocation6 + $0xc8] sm:$0xff]
    %v159 = vld [vmem:[#allocation6 + $0xd0] sm:$0xff]
    %v160 = vld [vmem:[#allocation6 + $0xd8] sm:$0xff]
    %v161 = vld [vmem:[#allocation6 + $0xe0] sm:$0xff]
    %v162 = vld [vmem:[#allocation6 + $0xe8] sm:$0xff]
    %v163 = vld [vmem:[#allocation6 + $0xf0] sm:$0xff]
    %v164 = vld [vmem:[#allocation6 + $0xf8] sm:$0xff]
    %v165 = vld [vmem:[#allocation6 + $0x100] sm:$0xff]
    %v166 = vld [vmem:[#allocation6 + $0x108] sm:$0xff]
    %v167 = vld [vmem:[#allocation6 + $0x110] sm:$0xff]
    %v168 = vld [vmem:[#allocation6 + $0x118] sm:$0xff]
    %v169 = vld [vmem:[#allocation6 + $0x120] sm:$0xff]
    %v170 = vld [vmem:[#allocation6 + $0x128] sm:$0xff]
    %v171 = vld [vmem:[#allocation6 + $0x130] sm:$0xff]
    %v172 = vld [vmem:[#allocation6 + $0x138] sm:$0xff]
    %v173 = vld [vmem:[#allocation6 + $0x140] sm:$0xff]
    %v174 = vld [vmem:[#allocation6 + $0x148] sm:$0xff]
    %v175 = vld [vmem:[#allocation6 + $0x150] sm:$0xff]
    %v176 = vld [vmem:[#allocation6 + $0x158] sm:$0xff]
    %v177 = vld [vmem:[#allocation6 + $0x160] sm:$0xff]
    %v178 = vld [vmem:[#allocation6 + $0x168] sm:$0xff]
    %v179 = vld [vmem:[#allocation6 + $0x170] sm:$0xff]
    %v180 = vld [vmem:[#allocation6 + $0x178] sm:$0xff]
    %v181 = vld [vmem:[#allocation6 + $0x180] sm:$0xff]
    %v182 = vld [vmem:[#allocation6 + $0x188] sm:$0xff]
    %v183 = vld [vmem:[#allocation6 + $0x190] sm:$0xff]
    %v184 = vld [vmem:[#allocation6 + $0x198] sm:$0xff]
    %v185 = vld [vmem:[#allocation6 + $0x1a0] sm:$0xff]
    %v186 = vld [vmem:[#allocation6 + $0x1a8] sm:$0xff]
    %v187 = vld [vmem:[#allocation6 + $0x1b0] sm:$0xff]
    %v188 = vld [vmem:[#allocation6 + $0x1b8] sm:$0xff]
    %v189 = vld [vmem:[#allocation6 + $0x1c0] sm:$0xff]
    %v190 = vld [vmem:[#allocation6 + $0x1c8] sm:$0xff]
    %v191 = vld [vmem:[#allocation6 + $0x1d0] sm:$0xff]
    %v192 = vld [vmem:[#allocation6 + $0x1d8] sm:$0xff]
    %v193 = vld [vmem:[#allocation6 + $0x1e0] sm:$0xff]
    %v194 = vld [vmem:[#allocation6 + $0x1e8] sm:$0xff]
    %v195 = vld [vmem:[#allocation6 + $0x1f0] sm:$0xff]
    %v196 = vld [vmem:[#allocation6 + $0x1f8] sm:$0xff]
    %v197 = vld [vmem:[#allocation6 + $0x200] sm:$0xff]
    %v198 = vld [vmem:[#allocation6 + $0x208] sm:$0xff]
    %v199 = vld [vmem:[#allocation6 + $0x210] sm:$0xff]
    %v200 = vld [vmem:[#allocation6 + $0x218] sm:$0xff]
    %v201 = vld [vmem:[#allocation6 + $0x220] sm:$0xff]
    %v202 = vld [vmem:[#allocation6 + $0x228] sm:$0xff]
    %v203 = vld [vmem:[#allocation6 + $0x230] sm:$0xff]
    %v204 = vld [vmem:[#allocation6 + $0x238] sm:$0xff]
    %v205 = vld [vmem:[#allocation6 + $0x240] sm:$0xff]
    %v206 = vld [vmem:[#allocation6 + $0x248] sm:$0xff]
    %v207 = vld [vmem:[#allocation6 + $0x250] sm:$0xff]
    %v208 = vld [vmem:[#allocation6 + $0x258] sm:$0xff]
    %v209 = vld [vmem:[#allocation6 + $0x260] sm:$0xff]
    %v210 = vld [vmem:[#allocation6 + $0x268] sm:$0xff]
    %v211 = vld [vmem:[#allocation6 + $0x270] sm:$0xff]
    %v212 = vld [vmem:[#allocation6 + $0x278] sm:$0xff]
    %v213 = vld [vmem:[#allocation6 + $0x280] sm:$0xff]
    %v214 = vld [vmem:[#allocation6 + $0x288] sm:$0xff]
    %v215 = vld [vmem:[#allocation6 + $0x290] sm:$0xff]
    %v216 = vld [vmem:[#allocation6 + $0x298] sm:$0xff]
    %v217 = vld [vmem:[#allocation6 + $0x2a0] sm:$0xff]
    %v218 = vld [vmem:[#allocation6 + $0x2a8] sm:$0xff]
    %v219 = vld [vmem:[#allocation6 + $0x2b0] sm:$0xff]
    %v220 = vld [vmem:[#allocation6 + $0x2b8] sm:$0xff]
    %v221 = vld [vmem:[#allocation6 + $0x2c0] sm:$0xff]
    %v222 = vld [vmem:[#allocation6 + $0x2c8] sm:$0xff]
    %v223 = vld [vmem:[#allocation6 + $0x2d0] sm:$0xff]
    %v224 = vld [vmem:[#allocation6 + $0x2d8] sm:$0xff]
    %v225 = vld [vmem:[#allocation6 + $0x2e0] sm:$0xff]
    %v226 = vld [vmem:[#allocation6 + $0x2e8] sm:$0xff]
    %v227 = vld [vmem:[#allocation6 + $0x2f0] sm:$0xff]
    %v228 = vld [vmem:[#allocation6 + $0x2f8] sm:$0xff]
    %v229 = vld [vmem:[#allocation6 + $0x300] sm:$0xff]
    %v230 = vld [vmem:[#allocation6 + $0x308] sm:$0xff]
    %v231 = vld [vmem:[#allocation6 + $0x310] sm:$0xff]
    %v232 = vld [vmem:[#allocation6 + $0x318] sm:$0xff]
    %v233 = vld [vmem:[#allocation6 + $0x320] sm:$0xff]
    %v234 = vld [vmem:[#allocation6 + $0x328] sm:$0xff]
    %v235 = vld [vmem:[#allocation6 + $0x330] sm:$0xff]
    %v236 = vld [vmem:[#allocation6 + $0x338] sm:$0xff]
    %v237 = vld [vmem:[#allocation6 + $0x340] sm:$0xff]
    %v238 = vld [vmem:[#allocation6 + $0x348] sm:$0xff]
    %v239 = vld [vmem:[#allocation6 + $0x350] sm:$0xff]
    %v240 = vld [vmem:[#allocation6 + $0x358] sm:$0xff]
    %v241 = vld [vmem:[#allocation6 + $0x360] sm:$0xff]
    %v242 = vld [vmem:[#allocation6 + $0x368] sm:$0xff]
    %v243 = vld [vmem:[#allocation6 + $0x370] sm:$0xff]
    %v244 = vld [vmem:[#allocation6 + $0x378] sm:$0xff]
    %v245 = vld [vmem:[#allocation6 + $0x380] sm:$0xff]
    %v246 = vld [vmem:[#allocation6 + $0x388] sm:$0xff]
    %v247 = vld [vmem:[#allocation6 + $0x390] sm:$0xff]
    %v248 = vld [vmem:[#allocation6 + $0x398] sm:$0xff]
    %v249 = vld [vmem:[#allocation6 + $0x3a0] sm:$0xff]
    %v250 = vld [vmem:[#allocation6 + $0x3a8] sm:$0xff]
    %v251 = vld [vmem:[#allocation6 + $0x3b0] sm:$0xff]
    %v252 = vld [vmem:[#allocation6 + $0x3b8] sm:$0xff]
    %v253 = vld [vmem:[#allocation6 + $0x3c0] sm:$0xff]
    %v254 = vld [vmem:[#allocation6 + $0x3c8] sm:$0xff]
    %v255 = vld [vmem:[#allocation6 + $0x3d0] sm:$0xff]
    %v256 = vld [vmem:[#allocation6 + $0x3d8] sm:$0xff]
    %v257 = vld [vmem:[#allocation6 + $0x3e0] sm:$0xff]
    %v258 = vld [vmem:[#allocation6 + $0x3e8] sm:$0xff]
    %v259 = vld [vmem:[#allocation6 + $0x3f0] sm:$0xff]
    %v260 = vld [vmem:[#allocation6 + $0x3f8] sm:$0xff]
    %v261 = vld [vmem:[%s2] sm:$0x3]
    %v263 = vlaneseq
    %v264 = vshrl.u32 %v263, 7
    %v265 = vsub.s32 0, %v264
    %v266 = vrot.slane %v261, %v265
    %v267 = vlaneseq
    %v268 = vshrl.u32 %v267, 7
    %v269 = vsub.s32 1, %v268
    %v270 = vrot.slane %v261, %v269
    %273 = vmatprep.subr.mxu0 %v164
    %274 = vmatpush1.msra.mxu0 %v163
    %275 = vmatprep.subr.mxu0 %v162
    %276 = vmatpush1.msra.mxu0 %v161
    %277 = vmatprep.subr.mxu0 %v160
    %278 = vmatpush1.msra.mxu0 %v159
    %279 = vmatprep.subr.mxu0 %v158
    %280 = vmatpush1.msra.mxu0 %v157
    %281 = vmatprep.subr.mxu0 %v156
    %282 = vmatpush1.msra.mxu0 %v155
    %283 = vmatprep.subr.mxu0 %v154
    %284 = vmatpush1.msra.mxu0 %v153
    %285 = vmatprep.subr.mxu0 %v152
    %286 = vmatpush1.msra.mxu0 %v151
    %287 = vmatprep.subr.mxu0 %v150
    %288 = vmatpush1.msra.mxu0 %v149
    %289 = vmatprep.subr.mxu0 %v148
    %290 = vmatpush1.msra.mxu0 %v147
    %291 = vmatprep.subr.mxu0 %v146
    %292 = vmatpush1.msra.mxu0 %v145
    %293 = vmatprep.subr.mxu0 %v144
    %294 = vmatpush1.msra.mxu0 %v143
    %295 = vmatprep.subr.mxu0 %v142
    %296 = vmatpush1.msra.mxu0 %v141
    %297 = vmatprep.subr.mxu0 %v140
    %298 = vmatpush1.msra.mxu0 %v139
    %299 = vmatprep.subr.mxu0 %v138
    %300 = vmatpush1.msra.mxu0 %v137
    %301 = vmatprep.subr.mxu0 %v136
    %302 = vmatpush1.msra.mxu0 %v135
    %303 = vmatprep.subr.mxu0 %v134
    %304 = vmatpush1.msra.mxu0 %v133
    %305 = vmatprep.subr.mxu0 %v196
    %306 = vmatpush2.msra.mxu0 %v195
    %307 = vmatprep.subr.mxu0 %v194
    %308 = vmatpush2.msra.mxu0 %v193
    %309 = vmatprep.subr.mxu0 %v192
    %310 = vmatpush2.msra.mxu0 %v191
    %311 = vmatprep.subr.mxu0 %v190
    %312 = vmatpush2.msra.mxu0 %v189
    %313 = vmatprep.subr.mxu0 %v188
    %314 = vmatpush2.msra.mxu0 %v187
    %315 = vmatprep.subr.mxu0 %v186
    %316 = vmatpush2.msra.mxu0 %v185
    %317 = vmatprep.subr.mxu0 %v184
    %318 = vmatpush2.msra.mxu0 %v183
    %319 = vmatprep.subr.mxu0 %v182
    %320 = vmatpush2.msra.mxu0 %v181
    %321 = vmatprep.subr.mxu0 %v180
    %322 = vmatpush2.msra.mxu0 %v179
    %323 = vmatprep.subr.mxu0 %v178
    %324 = vmatpush2.msra.mxu0 %v177
    %325 = vmatprep.subr.mxu0 %v176
    %326 = vmatpush2.msra.mxu0 %v175
    %327 = vmatprep.subr.mxu0 %v174
    %328 = vmatpush2.msra.mxu0 %v173
    %329 = vmatprep.subr.mxu0 %v172
    %330 = vmatpush2.msra.mxu0 %v171
    %331 = vmatprep.subr.mxu0 %v170
    %332 = vmatpush2.msra.mxu0 %v169
    %333 = vmatprep.subr.mxu0 %v168
    %334 = vmatpush2.msra.mxu0 %v167
    %335 = vmatprep.subr.mxu0 %v166
    %336 = vmatpush2.msra.mxu0 %v165
    %337 = vmatprep.mubr.f32.mxu0 %v70
    %338 = vmatmul.mubr.f32.gmra.mxu0 %v69
    %v339 = vpop.f32.mrf.mxu0
    %v340 = vadd.f32 %v266, %v339
    %v341 = vpop.f32.mrf.mxu0
    %v342 = vadd.f32 %v270, %v341
    %343 = vmatprep.mubr.f32.mxu0 %v74
    %344 = vmatmul.mubr.f32.gmra.mxu0 %v73
    %v345 = vpop.f32.mrf.mxu0
    %v346 = vadd.f32 %v266, %v345
    %v347 = vpop.f32.mrf.mxu0
    %v348 = vadd.f32 %v270, %v347
    %349 = vmatprep.mubr.f32.mxu0 %v78
    %350 = vmatmul.mubr.f32.gmra.mxu0 %v77
    %v351 = vpop.f32.mrf.mxu0
    %v352 = vadd.f32 %v266, %v351
    %v353 = vpop.f32.mrf.mxu0
    %v354 = vadd.f32 %v270, %v353
    %355 = vmatprep.mubr.f32.mxu0 %v82
    %356 = vmatmul.mubr.f32.gmra.mxu0 %v81
    %v357 = vpop.f32.mrf.mxu0
    %v358 = vadd.f32 %v266, %v357
    %v359 = vpop.f32.mrf.mxu0
    %v360 = vadd.f32 %v270, %v359
    %361 = vmatprep.mubr.f32.mxu0 %v86
    %362 = vmatmul.mubr.f32.gmra.mxu0 %v85
    %v363 = vpop.f32.mrf.mxu0
    %v364 = vadd.f32 %v266, %v363
    %v365 = vpop.f32.mrf.mxu0
    %v366 = vadd.f32 %v270, %v365
    %367 = vmatprep.mubr.f32.mxu0 %v90
    %368 = vmatmul.mubr.f32.gmra.mxu0 %v89
    %v369 = vpop.f32.mrf.mxu0
    %v370 = vadd.f32 %v266, %v369
    %v371 = vpop.f32.mrf.mxu0
    %v372 = vadd.f32 %v270, %v371
    %373 = vmatprep.mubr.f32.mxu0 %v94
    %374 = vmatmul.mubr.f32.gmra.mxu0 %v93
    %v375 = vpop.f32.mrf.mxu0
    %v376 = vadd.f32 %v266, %v375
    %v377 = vpop.f32.mrf.mxu0
    %v378 = vadd.f32 %v270, %v377
    %379 = vmatprep.mubr.f32.mxu0 %v98
    %380 = vmatmul.mubr.f32.gmra.mxu0 %v97
    %v381 = vpop.f32.mrf.mxu0
    %v382 = vadd.f32 %v266, %v381
    %v383 = vpop.f32.mrf.mxu0
    %v384 = vadd.f32 %v270, %v383
    %385 = vmatprep.mubr.f32.mxu0 %v102
    %386 = vmatmul.mubr.f32.gmra.mxu0 %v101
    %v387 = vpop.f32.mrf.mxu0
    %v388 = vadd.f32 %v266, %v387
    %v389 = vpop.f32.mrf.mxu0
    %v390 = vadd.f32 %v270, %v389
    %391 = vmatprep.mubr.f32.mxu0 %v106
    %392 = vmatmul.mubr.f32.gmra.mxu0 %v105
    %v393 = vpop.f32.mrf.mxu0
    %v394 = vadd.f32 %v266, %v393
    %v395 = vpop.f32.mrf.mxu0
    %v396 = vadd.f32 %v270, %v395
    %397 = vmatprep.mubr.f32.mxu0 %v110
    %398 = vmatmul.mubr.f32.gmra.mxu0 %v109
    %v399 = vpop.f32.mrf.mxu0
    %v400 = vadd.f32 %v266, %v399
    %v401 = vpop.f32.mrf.mxu0
    %v402 = vadd.f32 %v270, %v401
    %403 = vmatprep.mubr.f32.mxu0 %v114
    %404 = vmatmul.mubr.f32.gmra.mxu0 %v113
    %v405 = vpop.f32.mrf.mxu0
    %v406 = vadd.f32 %v266, %v405
    %v407 = vpop.f32.mrf.mxu0
    %v408 = vadd.f32 %v270, %v407
    %409 = vmatprep.mubr.f32.mxu0 %v118
    %410 = vmatmul.mubr.f32.gmra.mxu0 %v117
    %v411 = vpop.f32.mrf.mxu0
    %v412 = vadd.f32 %v266, %v411
    %v413 = vpop.f32.mrf.mxu0
    %v414 = vadd.f32 %v270, %v413
    %415 = vmatprep.mubr.f32.mxu0 %v122
    %416 = vmatmul.mubr.f32.gmra.mxu0 %v121
    %v417 = vpop.f32.mrf.mxu0
    %v418 = vadd.f32 %v266, %v417
    %v419 = vpop.f32.mrf.mxu0
    %v420 = vadd.f32 %v270, %v419
    %421 = vmatprep.mubr.f32.mxu0 %v126
    %422 = vmatmul.mubr.f32.gmra.mxu0 %v125
    %v423 = vpop.f32.mrf.mxu0
    %v424 = vadd.f32 %v266, %v423
    %v425 = vpop.f32.mrf.mxu0
    %v426 = vadd.f32 %v270, %v425
    %427 = vmatprep.mubr.f32.mxu0 %v130
    %428 = vmatmul.mubr.f32.gmra.mxu0 %v129
    %v429 = vpop.f32.mrf.mxu0
    %v430 = vadd.f32 %v266, %v429
    %v431 = vpop.f32.mrf.mxu0
    %v432 = vadd.f32 %v270, %v431
    %433 = vdwg.mxu0
    %434 = vmatprep.subr.mxu0 %v228
    %435 = vmatpush1.msra.mxu0 %v227
    %436 = vmatprep.subr.mxu0 %v226
    %437 = vmatpush1.msra.mxu0 %v225
    %438 = vmatprep.subr.mxu0 %v224
    %439 = vmatpush1.msra.mxu0 %v223
    %440 = vmatprep.subr.mxu0 %v222
    %441 = vmatpush1.msra.mxu0 %v221
    %442 = vmatprep.subr.mxu0 %v220
    %443 = vmatpush1.msra.mxu0 %v219
    %444 = vmatprep.subr.mxu0 %v218
    %445 = vmatpush1.msra.mxu0 %v217
    %446 = vmatprep.subr.mxu0 %v216
    %447 = vmatpush1.msra.mxu0 %v215
    %448 = vmatprep.subr.mxu0 %v214
    %449 = vmatpush1.msra.mxu0 %v213
    %450 = vmatprep.subr.mxu0 %v212
    %451 = vmatpush1.msra.mxu0 %v211
    %452 = vmatprep.subr.mxu0 %v210
    %453 = vmatpush1.msra.mxu0 %v209
    %454 = vmatprep.subr.mxu0 %v208
    %455 = vmatpush1.msra.mxu0 %v207
    %456 = vmatprep.subr.mxu0 %v206
    %457 = vmatpush1.msra.mxu0 %v205
    %458 = vmatprep.subr.mxu0 %v204
    %459 = vmatpush1.msra.mxu0 %v203
    %460 = vmatprep.subr.mxu0 %v202
    %461 = vmatpush1.msra.mxu0 %v201
    %462 = vmatprep.subr.mxu0 %v200
    %463 = vmatpush1.msra.mxu0 %v199
    %464 = vmatprep.subr.mxu0 %v198
    %465 = vmatpush1.msra.mxu0 %v197
    %466 = vmatprep.subr.mxu0 %v260
    %467 = vmatpush2.msra.mxu0 %v259
    %468 = vmatprep.subr.mxu0 %v258
    %469 = vmatpush2.msra.mxu0 %v257
    %470 = vmatprep.subr.mxu0 %v256
    %471 = vmatpush2.msra.mxu0 %v255
    %472 = vmatprep.subr.mxu0 %v254
    %473 = vmatpush2.msra.mxu0 %v253
    %474 = vmatprep.subr.mxu0 %v252
    %475 = vmatpush2.msra.mxu0 %v251
    %476 = vmatprep.subr.mxu0 %v250
    %477 = vmatpush2.msra.mxu0 %v249
    %478 = vmatprep.subr.mxu0 %v248
    %479 = vmatpush2.msra.mxu0 %v247
    %480 = vmatprep.subr.mxu0 %v246
    %481 = vmatpush2.msra.mxu0 %v245
    %482 = vmatprep.subr.mxu0 %v244
    %483 = vmatpush2.msra.mxu0 %v243
    %484 = vmatprep.subr.mxu0 %v242
    %485 = vmatpush2.msra.mxu0 %v241
    %486 = vmatprep.subr.mxu0 %v240
    %487 = vmatpush2.msra.mxu0 %v239
    %488 = vmatprep.subr.mxu0 %v238
    %489 = vmatpush2.msra.mxu0 %v237
    %490 = vmatprep.subr.mxu0 %v236
    %491 = vmatpush2.msra.mxu0 %v235
    %492 = vmatprep.subr.mxu0 %v234
    %493 = vmatpush2.msra.mxu0 %v233
    %494 = vmatprep.subr.mxu0 %v232
    %495 = vmatpush2.msra.mxu0 %v231
    %496 = vmatprep.subr.mxu0 %v230
    %497 = vmatpush2.msra.mxu0 %v229
    %498 = vmatprep.mubr.f32.mxu0 %v72
    %499 = vmatmul.mubr.f32.gmra.mxu0 %v71
    %v500 = vpop.f32.mrf.mxu0
    %v501 = vadd.f32 %v340, %v500
    %v502 = vpop.f32.mrf.mxu0
    %v503 = vadd.f32 %v342, %v502
    %504 = vmatprep.mubr.f32.mxu0 %v76
    %505 = vmatmul.mubr.f32.gmra.mxu0 %v75
    %v506 = vpop.f32.mrf.mxu0
    %v507 = vadd.f32 %v346, %v506
    %v508 = vpop.f32.mrf.mxu0
    %v509 = vadd.f32 %v348, %v508
    %510 = vmatprep.mubr.f32.mxu0 %v80
    %511 = vmatmul.mubr.f32.gmra.mxu0 %v79
    %v512 = vpop.f32.mrf.mxu0
    %v513 = vadd.f32 %v352, %v512
    %v514 = vpop.f32.mrf.mxu0
    %v515 = vadd.f32 %v354, %v514
    %516 = vmatprep.mubr.f32.mxu0 %v84
    %517 = vmatmul.mubr.f32.gmra.mxu0 %v83
    %v518 = vpop.f32.mrf.mxu0
    %v519 = vadd.f32 %v358, %v518
    %v520 = vpop.f32.mrf.mxu0
    %v521 = vadd.f32 %v360, %v520
    %522 = vmatprep.mubr.f32.mxu0 %v88
    %523 = vmatmul.mubr.f32.gmra.mxu0 %v87
    %v524 = vpop.f32.mrf.mxu0
    %v525 = vadd.f32 %v364, %v524
    %v526 = vpop.f32.mrf.mxu0
    %v527 = vadd.f32 %v366, %v526
    %528 = vmatprep.mubr.f32.mxu0 %v92
    %529 = vmatmul.mubr.f32.gmra.mxu0 %v91
    %v530 = vpop.f32.mrf.mxu0
    %v531 = vadd.f32 %v370, %v530
    %v532 = vpop.f32.mrf.mxu0
    %v533 = vadd.f32 %v372, %v532
    %534 = vmatprep.mubr.f32.mxu0 %v96
    %535 = vmatmul.mubr.f32.gmra.mxu0 %v95
    %v536 = vpop.f32.mrf.mxu0
    %v537 = vadd.f32 %v376, %v536
    %v538 = vpop.f32.mrf.mxu0
    %v539 = vadd.f32 %v378, %v538
    %540 = vmatprep.mubr.f32.mxu0 %v100
    %541 = vmatmul.mubr.f32.gmra.mxu0 %v99
    %v542 = vpop.f32.mrf.mxu0
    %v543 = vadd.f32 %v382, %v542
    %v544 = vpop.f32.mrf.mxu0
    %v545 = vadd.f32 %v384, %v544
    %546 = vmatprep.mubr.f32.mxu0 %v104
    %547 = vmatmul.mubr.f32.gmra.mxu0 %v103
    %v548 = vpop.f32.mrf.mxu0
    %v549 = vadd.f32 %v388, %v548
    %v550 = vpop.f32.mrf.mxu0
    %v551 = vadd.f32 %v390, %v550
    %552 = vmatprep.mubr.f32.mxu0 %v108
    %553 = vmatmul.mubr.f32.gmra.mxu0 %v107
    %v554 = vpop.f32.mrf.mxu0
    %v555 = vadd.f32 %v394, %v554
    %v556 = vpop.f32.mrf.mxu0
    %v557 = vadd.f32 %v396, %v556
    %558 = vmatprep.mubr.f32.mxu0 %v112
    %559 = vmatmul.mubr.f32.gmra.mxu0 %v111
    %v560 = vpop.f32.mrf.mxu0
    %v561 = vadd.f32 %v400, %v560
    %v562 = vpop.f32.mrf.mxu0
    %v563 = vadd.f32 %v402, %v562
    %564 = vmatprep.mubr.f32.mxu0 %v116
    %565 = vmatmul.mubr.f32.gmra.mxu0 %v115
    %v566 = vpop.f32.mrf.mxu0
    %v567 = vadd.f32 %v406, %v566
    %v568 = vpop.f32.mrf.mxu0
    %v569 = vadd.f32 %v408, %v568
    %570 = vmatprep.mubr.f32.mxu0 %v120
    %571 = vmatmul.mubr.f32.gmra.mxu0 %v119
    %v572 = vpop.f32.mrf.mxu0
    %v573 = vadd.f32 %v412, %v572
    %v574 = vpop.f32.mrf.mxu0
    %v575 = vadd.f32 %v414, %v574
    %576 = vmatprep.mubr.f32.mxu0 %v124
    %577 = vmatmul.mubr.f32.gmra.mxu0 %v123
    %v578 = vpop.f32.mrf.mxu0
    %v579 = vadd.f32 %v418, %v578
    %v580 = vpop.f32.mrf.mxu0
    %v581 = vadd.f32 %v420, %v580
    %582 = vmatprep.mubr.f32.mxu0 %v128
    %583 = vmatmul.mubr.f32.gmra.mxu0 %v127
    %v584 = vpop.f32.mrf.mxu0
    %v585 = vadd.f32 %v424, %v584
    %v586 = vpop.f32.mrf.mxu0
    %v587 = vadd.f32 %v426, %v586
    %588 = vmatprep.mubr.f32.mxu0 %v132
    %589 = vmatmul.mubr.f32.gmra.mxu0 %v131
    %v590 = vpop.f32.mrf.mxu0
    %v591 = vadd.f32 %v430, %v590
    %v592 = vpop.f32.mrf.mxu0
    %v593 = vadd.f32 %v432, %v592
    %594 = vdwg.mxu0
    %v595 = vmax.f32 %v501, 0.0
    %v596 = vmax.f32 %v503, 0.0
    %v597 = vmax.f32 %v507, 0.0
    %v598 = vmax.f32 %v509, 0.0
    %v599 = vmax.f32 %v513, 0.0
    %v600 = vmax.f32 %v515, 0.0
    %v601 = vmax.f32 %v519, 0.0
    %v602 = vmax.f32 %v521, 0.0
    %v603 = vmax.f32 %v525, 0.0
    %v604 = vmax.f32 %v527, 0.0
    %v605 = vmax.f32 %v531, 0.0
    %v606 = vmax.f32 %v533, 0.0
    %v607 = vmax.f32 %v537, 0.0
    %v608 = vmax.f32 %v539, 0.0
    %v609 = vmax.f32 %v543, 0.0
    %v610 = vmax.f32 %v545, 0.0
    %v611 = vmax.f32 %v549, 0.0
    %v612 = vmax.f32 %v551, 0.0
    %v613 = vmax.f32 %v555, 0.0
    %v614 = vmax.f32 %v557, 0.0
    %v615 = vmax.f32 %v561, 0.0
    %v616 = vmax.f32 %v563, 0.0
    %v617 = vmax.f32 %v567, 0.0
    %v618 = vmax.f32 %v569, 0.0
    %v619 = vmax.f32 %v573, 0.0
    %v620 = vmax.f32 %v575, 0.0
    %v621 = vmax.f32 %v579, 0.0
    %v622 = vmax.f32 %v581, 0.0
    %v623 = vmax.f32 %v585, 0.0
    %v624 = vmax.f32 %v587, 0.0
    %v625 = vmax.f32 %v591, 0.0
    %v626 = vmax.f32 %v593, 0.0
    %v627 = vld [vmem:[#allocation8] sm:$0xff]
    %v628 = vld [vmem:[#allocation8 + $0x8] sm:$0xff]
    %v629 = vld [vmem:[#allocation8 + $0x10] sm:$0xff]
    %v630 = vld [vmem:[#allocation8 + $0x18] sm:$0xff]
    %v631 = vld [vmem:[#allocation8 + $0x20] sm:$0xff]
    %v632 = vld [vmem:[#allocation8 + $0x28] sm:$0xff]
    %v633 = vld [vmem:[#allocation8 + $0x30] sm:$0xff]
    %v634 = vld [vmem:[#allocation8 + $0x38] sm:$0xff]
    %v635 = vld [vmem:[#allocation8 + $0x40] sm:$0xff]
    %v636 = vld [vmem:[#allocation8 + $0x48] sm:$0xff]
    %v637 = vld [vmem:[#allocation8 + $0x50] sm:$0xff]
    %v638 = vld [vmem:[#allocation8 + $0x58] sm:$0xff]
    %v639 = vld [vmem:[#allocation8 + $0x60] sm:$0xff]
    %v640 = vld [vmem:[#allocation8 + $0x68] sm:$0xff]
    %v641 = vld [vmem:[#allocation8 + $0x70] sm:$0xff]
    %v642 = vld [vmem:[#allocation8 + $0x78] sm:$0xff]
    %v643 = vld [vmem:[#allocation8 + $0x80] sm:$0xff]
    %v644 = vld [vmem:[#allocation8 + $0x88] sm:$0xff]
    %v645 = vld [vmem:[#allocation8 + $0x90] sm:$0xff]
    %v646 = vld [vmem:[#allocation8 + $0x98] sm:$0xff]
    %v647 = vld [vmem:[#allocation8 + $0xa0] sm:$0xff]
    %v648 = vld [vmem:[#allocation8 + $0xa8] sm:$0xff]
    %v649 = vld [vmem:[#allocation8 + $0xb0] sm:$0xff]
    %v650 = vld [vmem:[#allocation8 + $0xb8] sm:$0xff]
    %v651 = vld [vmem:[#allocation8 + $0xc0] sm:$0xff]
    %v652 = vld [vmem:[#allocation8 + $0xc8] sm:$0xff]
    %v653 = vld [vmem:[#allocation8 + $0xd0] sm:$0xff]
    %v654 = vld [vmem:[#allocation8 + $0xd8] sm:$0xff]
    %v655 = vld [vmem:[#allocation8 + $0xe0] sm:$0xff]
    %v656 = vld [vmem:[#allocation8 + $0xe8] sm:$0xff]
    %v657 = vld [vmem:[#allocation8 + $0xf0] sm:$0xff]
    %v658 = vld [vmem:[#allocation8 + $0xf8] sm:$0xff]
    %v659 = vld [vmem:[#allocation8 + $0x100] sm:$0xff]
    %v660 = vld [vmem:[#allocation8 + $0x108] sm:$0xff]
    %v661 = vld [vmem:[#allocation8 + $0x110] sm:$0xff]
    %v662 = vld [vmem:[#allocation8 + $0x118] sm:$0xff]
    %v663 = vld [vmem:[#allocation8 + $0x120] sm:$0xff]
    %v664 = vld [vmem:[#allocation8 + $0x128] sm:$0xff]
    %v665 = vld [vmem:[#allocation8 + $0x130] sm:$0xff]
    %v666 = vld [vmem:[#allocation8 + $0x138] sm:$0xff]
    %v667 = vld [vmem:[#allocation8 + $0x140] sm:$0xff]
    %v668 = vld [vmem:[#allocation8 + $0x148] sm:$0xff]
    %v669 = vld [vmem:[#allocation8 + $0x150] sm:$0xff]
    %v670 = vld [vmem:[#allocation8 + $0x158] sm:$0xff]
    %v671 = vld [vmem:[#allocation8 + $0x160] sm:$0xff]
    %v672 = vld [vmem:[#allocation8 + $0x168] sm:$0xff]
    %v673 = vld [vmem:[#allocation8 + $0x170] sm:$0xff]
    %v674 = vld [vmem:[#allocation8 + $0x178] sm:$0xff]
    %v675 = vld [vmem:[#allocation8 + $0x180] sm:$0xff]
    %v676 = vld [vmem:[#allocation8 + $0x188] sm:$0xff]
    %v677 = vld [vmem:[#allocation8 + $0x190] sm:$0xff]
    %v678 = vld [vmem:[#allocation8 + $0x198] sm:$0xff]
    %v679 = vld [vmem:[#allocation8 + $0x1a0] sm:$0xff]
    %v680 = vld [vmem:[#allocation8 + $0x1a8] sm:$0xff]
    %v681 = vld [vmem:[#allocation8 + $0x1b0] sm:$0xff]
    %v682 = vld [vmem:[#allocation8 + $0x1b8] sm:$0xff]
    %v683 = vld [vmem:[#allocation8 + $0x1c0] sm:$0xff]
    %v684 = vld [vmem:[#allocation8 + $0x1c8] sm:$0xff]
    %v685 = vld [vmem:[#allocation8 + $0x1d0] sm:$0xff]
    %v686 = vld [vmem:[#allocation8 + $0x1d8] sm:$0xff]
    %v687 = vld [vmem:[#allocation8 + $0x1e0] sm:$0xff]
    %v688 = vld [vmem:[#allocation8 + $0x1e8] sm:$0xff]
    %v689 = vld [vmem:[#allocation8 + $0x1f0] sm:$0xff]
    %v690 = vld [vmem:[#allocation8 + $0x1f8] sm:$0xff]
    %v691 = vld [vmem:[%s4] sm:$0x3]
    %v693 = vlaneseq
    %v694 = vshrl.u32 %v693, 7
    %v695 = vsub.s32 0, %v694
    %v696 = vrot.slane %v691, %v695
    %v697 = vlaneseq
    %v698 = vshrl.u32 %v697, 7
    %v699 = vsub.s32 1, %v698
    %v700 = vrot.slane %v691, %v699
    %703 = vmatprep.subr.mxu0 %v658
    %704 = vmatpush1.msra.mxu0 %v657
    %705 = vmatprep.subr.mxu0 %v656
    %706 = vmatpush1.msra.mxu0 %v655
    %707 = vmatprep.subr.mxu0 %v654
    %708 = vmatpush1.msra.mxu0 %v653
    %709 = vmatprep.subr.mxu0 %v652
    %710 = vmatpush1.msra.mxu0 %v651
    %711 = vmatprep.subr.mxu0 %v650
    %712 = vmatpush1.msra.mxu0 %v649
    %713 = vmatprep.subr.mxu0 %v648
    %714 = vmatpush1.msra.mxu0 %v647
    %715 = vmatprep.subr.mxu0 %v646
    %716 = vmatpush1.msra.mxu0 %v645
    %717 = vmatprep.subr.mxu0 %v644
    %718 = vmatpush1.msra.mxu0 %v643
    %719 = vmatprep.subr.mxu0 %v642
    %720 = vmatpush1.msra.mxu0 %v641
    %721 = vmatprep.subr.mxu0 %v640
    %722 = vmatpush1.msra.mxu0 %v639
    %723 = vmatprep.subr.mxu0 %v638
    %724 = vmatpush1.msra.mxu0 %v637
    %725 = vmatprep.subr.mxu0 %v636
    %726 = vmatpush1.msra.mxu0 %v635
    %727 = vmatprep.subr.mxu0 %v634
    %728 = vmatpush1.msra.mxu0 %v633
    %729 = vmatprep.subr.mxu0 %v632
    %730 = vmatpush1.msra.mxu0 %v631
    %731 = vmatprep.subr.mxu0 %v630
    %732 = vmatpush1.msra.mxu0 %v629
    %733 = vmatprep.subr.mxu0 %v628
    %734 = vmatpush1.msra.mxu0 %v627
    %735 = vmatprep.subr.mxu0 %v690
    %736 = vmatpush2.msra.mxu0 %v689
    %737 = vmatprep.subr.mxu0 %v688
    %738 = vmatpush2.msra.mxu0 %v687
    %739 = vmatprep.subr.mxu0 %v686
    %740 = vmatpush2.msra.mxu0 %v685
    %741 = vmatprep.subr.mxu0 %v684
    %742 = vmatpush2.msra.mxu0 %v683
    %743 = vmatprep.subr.mxu0 %v682
    %744 = vmatpush2.msra.mxu0 %v681
    %745 = vmatprep.subr.mxu0 %v680
    %746 = vmatpush2.msra.mxu0 %v679
    %747 = vmatprep.subr.mxu0 %v678
    %748 = vmatpush2.msra.mxu0 %v677
    %749 = vmatprep.subr.mxu0 %v676
    %750 = vmatpush2.msra.mxu0 %v675
    %751 = vmatprep.subr.mxu0 %v674
    %752 = vmatpush2.msra.mxu0 %v673
    %753 = vmatprep.subr.mxu0 %v672
    %754 = vmatpush2.msra.mxu0 %v671
    %755 = vmatprep.subr.mxu0 %v670
    %756 = vmatpush2.msra.mxu0 %v669
    %757 = vmatprep.subr.mxu0 %v668
    %758 = vmatpush2.msra.mxu0 %v667
    %759 = vmatprep.subr.mxu0 %v666
    %760 = vmatpush2.msra.mxu0 %v665
    %761 = vmatprep.subr.mxu0 %v664
    %762 = vmatpush2.msra.mxu0 %v663
    %763 = vmatprep.subr.mxu0 %v662
    %764 = vmatpush2.msra.mxu0 %v661
    %765 = vmatprep.subr.mxu0 %v660
    %766 = vmatpush2.msra.mxu0 %v659
    %767 = vmatprep.mubr.f32.mxu0 %v596
    %768 = vmatmul.mubr.f32.gmra.mxu0 %v595
    %v769 = vpop.f32.mrf.mxu0
    %v770 = vadd.f32 %v696, %v769
    %v771 = vpop.f32.mrf.mxu0
    %v772 = vadd.f32 %v700, %v771
    %773 = vmatprep.mubr.f32.mxu0 %v598
    %774 = vmatmul.mubr.f32.gmra.mxu0 %v597
    %v775 = vpop.f32.mrf.mxu0
    %v776 = vadd.f32 %v696, %v775
    %v777 = vpop.f32.mrf.mxu0
    %v778 = vadd.f32 %v700, %v777
    %779 = vmatprep.mubr.f32.mxu0 %v600
    %780 = vmatmul.mubr.f32.gmra.mxu0 %v599
    %v781 = vpop.f32.mrf.mxu0
    %v782 = vadd.f32 %v696, %v781
    %v783 = vpop.f32.mrf.mxu0
    %v784 = vadd.f32 %v700, %v783
    %785 = vmatprep.mubr.f32.mxu0 %v602
    %786 = vmatmul.mubr.f32.gmra.mxu0 %v601
    %v787 = vpop.f32.mrf.mxu0
    %v788 = vadd.f32 %v696, %v787
    %v789 = vpop.f32.mrf.mxu0
    %v790 = vadd.f32 %v700, %v789
    %791 = vmatprep.mubr.f32.mxu0 %v604
    %792 = vmatmul.mubr.f32.gmra.mxu0 %v603
    %v793 = vpop.f32.mrf.mxu0
    %v794 = vadd.f32 %v696, %v793
    %v795 = vpop.f32.mrf.mxu0
    %v796 = vadd.f32 %v700, %v795
    %797 = vmatprep.mubr.f32.mxu0 %v606
    %798 = vmatmul.mubr.f32.gmra.mxu0 %v605
    %v799 = vpop.f32.mrf.mxu0
    %v800 = vadd.f32 %v696, %v799
    %v801 = vpop.f32.mrf.mxu0
    %v802 = vadd.f32 %v700, %v801
    %803 = vmatprep.mubr.f32.mxu0 %v608
    %804 = vmatmul.mubr.f32.gmra.mxu0 %v607
    %v805 = vpop.f32.mrf.mxu0
    %v806 = vadd.f32 %v696, %v805
    %v807 = vpop.f32.mrf.mxu0
    %v808 = vadd.f32 %v700, %v807
    %809 = vmatprep.mubr.f32.mxu0 %v610
    %810 = vmatmul.mubr.f32.gmra.mxu0 %v609
    %v811 = vpop.f32.mrf.mxu0
    %v812 = vadd.f32 %v696, %v811
    %v813 = vpop.f32.mrf.mxu0
    %v814 = vadd.f32 %v700, %v813
    %815 = vmatprep.mubr.f32.mxu0 %v612
    %816 = vmatmul.mubr.f32.gmra.mxu0 %v611
    %v817 = vpop.f32.mrf.mxu0
    %v818 = vadd.f32 %v696, %v817
    %v819 = vpop.f32.mrf.mxu0
    %v820 = vadd.f32 %v700, %v819
    %821 = vmatprep.mubr.f32.mxu0 %v614
    %822 = vmatmul.mubr.f32.gmra.mxu0 %v613
    %v823 = vpop.f32.mrf.mxu0
    %v824 = vadd.f32 %v696, %v823
    %v825 = vpop.f32.mrf.mxu0
    %v826 = vadd.f32 %v700, %v825
    %827 = vmatprep.mubr.f32.mxu0 %v616
    %828 = vmatmul.mubr.f32.gmra.mxu0 %v615
    %v829 = vpop.f32.mrf.mxu0
    %v830 = vadd.f32 %v696, %v829
    %v831 = vpop.f32.mrf.mxu0
    %v832 = vadd.f32 %v700, %v831
    %833 = vmatprep.mubr.f32.mxu0 %v618
    %834 = vmatmul.mubr.f32.gmra.mxu0 %v617
    %v835 = vpop.f32.mrf.mxu0
    %v836 = vadd.f32 %v696, %v835
    %v837 = vpop.f32.mrf.mxu0
    %v838 = vadd.f32 %v700, %v837
    %839 = vmatprep.mubr.f32.mxu0 %v620
    %840 = vmatmul.mubr.f32.gmra.mxu0 %v619
    %v841 = vpop.f32.mrf.mxu0
    %v842 = vadd.f32 %v696, %v841
    %v843 = vpop.f32.mrf.mxu0
    %v844 = vadd.f32 %v700, %v843
    %845 = vmatprep.mubr.f32.mxu0 %v622
    %846 = vmatmul.mubr.f32.gmra.mxu0 %v621
    %v847 = vpop.f32.mrf.mxu0
    %v848 = vadd.f32 %v696, %v847
    %v849 = vpop.f32.mrf.mxu0
    %v850 = vadd.f32 %v700, %v849
    %851 = vmatprep.mubr.f32.mxu0 %v624
    %852 = vmatmul.mubr.f32.gmra.mxu0 %v623
    %v853 = vpop.f32.mrf.mxu0
    %v854 = vadd.f32 %v696, %v853
    %v855 = vpop.f32.mrf.mxu0
    %v856 = vadd.f32 %v700, %v855
    %857 = vmatprep.mubr.f32.mxu0 %v626
    %858 = vmatmul.mubr.f32.gmra.mxu0 %v625
    %v859 = vpop.f32.mrf.mxu0
    %v860 = vadd.f32 %v696, %v859
    %v861 = vpop.f32.mrf.mxu0
    %v862 = vadd.f32 %v700, %v861
    %863 = vdwg.mxu0
    %v864 = vmax.f32 %v770, 0.0
    %v865 = vmax.f32 %v772, 0.0
    %v866 = vmax.f32 %v776, 0.0
    %v867 = vmax.f32 %v778, 0.0
    %v868 = vmax.f32 %v782, 0.0
    %v869 = vmax.f32 %v784, 0.0
    %v870 = vmax.f32 %v788, 0.0
    %v871 = vmax.f32 %v790, 0.0
    %v872 = vmax.f32 %v794, 0.0
    %v873 = vmax.f32 %v796, 0.0
    %v874 = vmax.f32 %v800, 0.0
    %v875 = vmax.f32 %v802, 0.0
    %v876 = vmax.f32 %v806, 0.0
    %v877 = vmax.f32 %v808, 0.0
    %v878 = vmax.f32 %v812, 0.0
    %v879 = vmax.f32 %v814, 0.0
    %v880 = vmax.f32 %v818, 0.0
    %v881 = vmax.f32 %v820, 0.0
    %v882 = vmax.f32 %v824, 0.0
    %v883 = vmax.f32 %v826, 0.0
    %v884 = vmax.f32 %v830, 0.0
    %v885 = vmax.f32 %v832, 0.0
    %v886 = vmax.f32 %v836, 0.0
    %v887 = vmax.f32 %v838, 0.0
    %v888 = vmax.f32 %v842, 0.0
    %v889 = vmax.f32 %v844, 0.0
    %v890 = vmax.f32 %v848, 0.0
    %v891 = vmax.f32 %v850, 0.0
    %v892 = vmax.f32 %v854, 0.0
    %v893 = vmax.f32 %v856, 0.0
    %v894 = vmax.f32 %v860, 0.0
    %v895 = vmax.f32 %v862, 0.0
    %v896 = vld [vmem:[%s5] sm:$0x3]
    %s897 = sld [smem:[#allocation2]]
    %v898 = vstv %s897
    %v900 = vlaneseq
    %v901 = vshrl.u32 %v900, 7
    %v902 = vsub.s32 0, %v901
    %v903 = vrot.slane %v896, %v902
    %v904 = vlaneseq
    %v905 = vshrl.u32 %v904, 7
    %v906 = vsub.s32 1, %v905
    %v907 = vrot.slane %v896, %v906
    %910 = vmatprep.subr.mxu0 %v895
    %911 = vmatpush1.xpose.msra.mxu0 %v894
    %912 = vmatprep.subr.mxu0 %v893
    %913 = vmatpush1.xpose.msra.mxu0 %v892
    %914 = vmatprep.subr.mxu0 %v891
    %915 = vmatpush1.xpose.msra.mxu0 %v890
    %916 = vmatprep.subr.mxu0 %v889
    %917 = vmatpush1.xpose.msra.mxu0 %v888
    %918 = vmatprep.subr.mxu0 %v887
    %919 = vmatpush1.xpose.msra.mxu0 %v886
    %920 = vmatprep.subr.mxu0 %v885
    %921 = vmatpush1.xpose.msra.mxu0 %v884
    %922 = vmatprep.subr.mxu0 %v883
    %923 = vmatpush1.xpose.msra.mxu0 %v882
    %924 = vmatprep.subr.mxu0 %v881
    %925 = vmatpush1.xpose.msra.mxu0 %v880
    %926 = vmatprep.subr.mxu0 %v879
    %927 = vmatpush1.xpose.msra.mxu0 %v878
    %928 = vmatprep.subr.mxu0 %v877
    %929 = vmatpush1.xpose.msra.mxu0 %v876
    %930 = vmatprep.subr.mxu0 %v875
    %931 = vmatpush1.xpose.msra.mxu0 %v874
    %932 = vmatprep.subr.mxu0 %v873
    %933 = vmatpush1.xpose.msra.mxu0 %v872
    %934 = vmatprep.subr.mxu0 %v871
    %935 = vmatpush1.xpose.msra.mxu0 %v870
    %936 = vmatprep.subr.mxu0 %v869
    %937 = vmatpush1.xpose.msra.mxu0 %v868
    %938 = vmatprep.subr.mxu0 %v867
    %939 = vmatpush1.xpose.msra.mxu0 %v866
    %940 = vmatprep.subr.mxu0 %v865
    %941 = vmatpush1.xpose.msra.mxu0 %v864
    %942 = vmatprep.subr.mxu0 0.0
    %943 = vmatpush2.xpose.msra.mxu0 0.0
    %944 = vmatprep.subr.mxu0 0.0
    %945 = vmatpush2.xpose.msra.mxu0 0.0
    %946 = vmatprep.subr.mxu0 0.0
    %947 = vmatpush2.xpose.msra.mxu0 0.0
    %948 = vmatprep.subr.mxu0 0.0
    %949 = vmatpush2.xpose.msra.mxu0 0.0
    %950 = vmatprep.subr.mxu0 0.0
    %951 = vmatpush2.xpose.msra.mxu0 0.0
    %952 = vmatprep.subr.mxu0 0.0
    %953 = vmatpush2.xpose.msra.mxu0 0.0
    %954 = vmatprep.subr.mxu0 0.0
    %955 = vmatpush2.xpose.msra.mxu0 0.0
    %956 = vmatprep.subr.mxu0 0.0
    %957 = vmatpush2.xpose.msra.mxu0 0.0
    %958 = vmatprep.subr.mxu0 0.0
    %959 = vmatpush2.xpose.msra.mxu0 0.0
    %960 = vmatprep.subr.mxu0 0.0
    %961 = vmatpush2.xpose.msra.mxu0 0.0
    %962 = vmatprep.subr.mxu0 0.0
    %963 = vmatpush2.xpose.msra.mxu0 0.0
    %964 = vmatprep.subr.mxu0 0.0
    %965 = vmatpush2.xpose.msra.mxu0 0.0
    %966 = vmatprep.subr.mxu0 0.0
    %967 = vmatpush2.xpose.msra.mxu0 0.0
    %968 = vmatprep.subr.mxu0 0.0
    %969 = vmatpush2.xpose.msra.mxu0 0.0
    %970 = vmatprep.subr.mxu0 0.0
    %971 = vmatpush2.xpose.msra.mxu0 0.0
    %972 = vmatprep.subr.mxu0 0.0
    %973 = vmatpush2.xpose.msra.mxu0 0.0
    %974 = vmatprep.mubr.f32.mxu0 %v907
    %975 = vmatmul.mubr.f32.gmra.mxu0 %v903
    %v976 = vpop.f32.mrf.mxu0
    %v977 = vadd.f32 %v898, %v976
    %v978 = vpop.f32.mrf.mxu0
    %979 = vdwg.mxu0
    %v980 = vxor.u32 %v977, 2147483648
    %v981 = vmul.f32 %v980, 1.442695
    %v982 = vpow.pop %v981
    %v983 = vadd.f32 %v982, 1.0
    %v984 = vrcp.pop %v983
    %v985 = vmul.f32 1.0, %v984
    %986 = vst [vmem:[#allocation9] sm:$0x1] %v985
    // Predicated region
    $region42: #{tpu_custom_call.1} parent=1 // pred_check
      _
    $region43: #{tpu_custom_call.1} parent=1 // pred_check_branch
      %988 = sbr.rel (0) target = $region45
    $region44: #{tpu_custom_call.1} parent=1 // pred_region
      %s990 = ssub.s32 16, 16
      %991 = vsyncadd [#allocation5], %s990
      %s993 = sshll.u32 [#allocation9], 4
      %s994 = int_to_ptr.vmem [resolvable:$true] %s993
      %996 = dma.vmem_to_hbm [thread:$0]  %s994, 16, %s7, [#allocation5]
    $region45: #{tpu_custom_call.1} parent=1 // pred_fallthru
      _
    // Predicated region
    $region46: #{tpu_custom_call.1} parent=1 // pred_check
      _
    $region47: #{tpu_custom_call.1} parent=1 // pred_check_branch
      %998 = sbr.rel (0) target = $region49
    $region48: #{tpu_custom_call.1} parent=1 // pred_region
      %999 = dma.done [#allocation5], 16
    $region49: #{tpu_custom_call.1} parent=1 // pred_fallthru
      _
    %1000 = vsyncpa [#allocation4], 1
    %1001 = vsyncpa [#allocation7], 1
    %1002 = vsyncpa [#allocation5], 1

</llo_original>
